<compile_context>
chip_gen: v7x
topology: tpu7x:2x2x1
jax: 0.10.0
libtpu: 0.0.40
codegen_flags: <defaults>
</compile_context>

<pallas_src>
import functools
import math

import jax
import jax.numpy as jnp
from jax.experimental import pallas as pl
from jax.experimental.pallas import tpu as pltpu


def positional_encoding_kernel(xt_ref, out_ref, *, pe_dim):
    # xt_ref:  (3, tm) tile — points on the lane axis.
    # out_ref: (6*L, tm) lane-dense output tile.
    L = pe_dim

    # freqs = pi * 2**k as a per-sublane constant column, built in-kernel and
    # bit-exact: 2**k == bitcast(float32, (k + 127) << 23) for 0 <= k < 128.
    k = jax.lax.broadcasted_iota(jnp.int32, (L, 1), 0)          # (L, 1)
    pow2 = pltpu.bitcast((k + 127) << 23, jnp.float32)          # exact 2**k
    freqs = math.pi * pow2                                       # (L, 1)

    for j in range(3):                                           # unrolled x/y/z
        # (1, tm) * (L, 1) -> (L, tm): sublane broadcast of the coordinate row,
        # lane broadcast of the per-sublane frequency — no cross-lane shuffles.
        p = xt_ref[j:j + 1, :] * freqs
        out_ref[j * L:(j + 1) * L, :] = jnp.sin(p)
        out_ref[(3 + j) * L:(4 + j) * L, :] = jnp.cos(p)


def positional_encoding(xyz, pe_dim, *, tm=None):
    """Pallas TPU implementation of PositionalEncoding.forward.

    xyz: (N, 3) float32. Returns (N, 6 * pe_dim) float32.
    """
    N, C = xyz.shape
    assert C == 3, "PositionalEncoding expects xyz with last dim == 3"
    assert 1 <= pe_dim <= 127, "exponent-bit 2**k trick requires pe_dim <= 127"
    L = pe_dim
    out_rows = 6 * L

    def rup(v, m):
        return ((v + m - 1) // m) * m

    # Points go on the lane axis: feed the kernel xyz transposed, (3, N).
    xt = xyz.T

    # --- tile size with correct VMEM accounting ---------------------------
    # Per grid step (all lane-dense, f32):
    #   in  block (3 -> 8 sublanes, tm)   x2 (double buffered)
    #   out block (rup(6L, 8), tm)        x2 (double buffered)
    #   ~4 (L, tm) trig temps (p, sin, cos + slack)
    # Target ~8 MiB so we stay inside the scoped-VMEM default on every
    # generation (v5e 16 MiB, v6e 32 MiB, v7x 32 MiB scoped / 64 MiB physical).
    bytes_per_col = 2 * (8 * 4) + 2 * (rup(out_rows, 8) * 4) + 4 * L * 4
    vmem_budget = 8 * 1024 * 1024
    tm_cap = max(128, ((vmem_budget // bytes_per_col) // 128) * 128)

    if tm is None:
        tm = tm_cap
    tm = max(128, (min(tm, tm_cap) // 128) * 128)
    # Never wider than the lane-rounded problem ...
    tm = min(tm, rup(N, 128))
    # ... and prefer >=2 grid steps for mid-sized N so the "parallel" grid axis
    # can split across both v7x TensorCores.
    if tm >= N and N > 128:
        tm = rup(pl.cdiv(N, 2), 128)

    n_tiles = pl.cdiv(N, tm)
    N_pad = n_tiles * tm
    if N_pad != N:
        # Input-side pad only (12 B/point, negligible); the padded *output*
        # columns are never re-read (the lane slice below fuses into the
        # wrapper transpose).
        xt = jnp.pad(xt, ((0, 0), (0, N_pad - N)))

    kernel = functools.partial(positional_encoding_kernel, pe_dim=pe_dim)

    out_t = pl.pallas_call(
        kernel,
        out_shape=jax.ShapeDtypeStruct((out_rows, N_pad), jnp.float32),
        grid_spec=pltpu.PrefetchScalarGridSpec(
            num_scalar_prefetch=0,
            grid=(n_tiles,),
            in_specs=[
                pl.BlockSpec((3, tm), lambda i: (0, i)),       # (3, tm) points
            ],
            out_specs=pl.BlockSpec((out_rows, tm), lambda i: (0, i)),
        ),
        compiler_params=pltpu.CompilerParams(
            dimension_semantics=("parallel",)),
    )(xt)

    # Restore the module's (N, 6L) row layout.  A consumer that can read the
    # lane-dense (6L, N) layout directly should skip this transpose.
    return out_t[:, :N].T


def positional_encoding_ref(xyz, pe_dim):
    freqs = math.pi * (2.0 ** jnp.arange(pe_dim, dtype=jnp.float32))
    prod = xyz[:, :, None] * freqs[None, None, :]                # (N, 3, L)
    s = jnp.sin(prod).reshape(xyz.shape[0], 3 * pe_dim)
    c = jnp.cos(prod).reshape(xyz.shape[0], 3 * pe_dim)
    return jnp.concatenate([s, c], axis=-1)


if __name__ == "__main__":
    key = jax.random.PRNGKey(0)
    N = 16
    PE_DIM = 8
    xyz = jax.random.normal(key, (N, 3), dtype=jnp.float32)

    out = positional_encoding(xyz, PE_DIM)
    out = jax.block_until_ready(out)

    ref = positional_encoding_ref(xyz, PE_DIM)
    assert out.shape == (N, 6 * PE_DIM), out.shape
    assert jnp.allclose(out, ref, atol=1e-5, rtol=1e-5), "mismatch vs reference"

    print("KERNEL_OK")
</pallas_src>

<mosaic_0001>
module attributes {stable_mosaic.version = 11 : i64} {
  func.func @positional_encoding_kernel(%arg0: i32, %arg1: memref<3x128xf32, #tpu.memory_space<vmem>>, %arg2: memref<48x128xf32, #tpu.memory_space<vmem>>) attributes {dimension_semantics = [#tpu.dimension_semantics<parallel>], iteration_bounds = array<i64: 1>, scalar_prefetch = 0 : i64, scratch_operands = 0 : i64, tpu.core_type = #tpu.core_type<tc>, window_params = [{transform_indices = @transform_0, window_bounds = array<i64: 3, 128>}, {transform_indices = @transform_1, window_bounds = array<i64: 48, 128>}]} {
    %0 = tpu.iota {dimensions = array<i32: 0>} : vector<8x1xi32>
    %c127_i32 = arith.constant 127 : i32
    %1 = vector.broadcast %c127_i32 : i32 to vector<8x1xi32>
    %2 = arith.addi %0, %1 : vector<8x1xi32>
    %c23_i32 = arith.constant 23 : i32
    %3 = vector.broadcast %c23_i32 : i32 to vector<8x1xi32>
    %4 = arith.shli %2, %3 : vector<8x1xi32>
    %5 = tpu.bitcast %4 : vector<8x1xi32> -> vector<8x1xf32>
    %cst = arith.constant 3.14159274 : f32
    %6 = vector.broadcast %cst : f32 to vector<8x1xf32>
    %7 = arith.mulf %6, %5 : vector<8x1xf32>
    %c0 = arith.constant 0 : index
    %c0_0 = arith.constant 0 : index
    %8 = vector.load %arg1[%c0, %c0_0] : memref<3x128xf32, #tpu.memory_space<vmem>>, vector<1x128xf32>
    %9 = vector.broadcast %8 : vector<1x128xf32> to vector<8x128xf32>
    %10 = vector.broadcast %7 : vector<8x1xf32> to vector<8x128xf32>
    %11 = arith.mulf %9, %10 : vector<8x128xf32>
    %12 = math.sin %11 : vector<8x128xf32>
    %c0_1 = arith.constant 0 : index
    %c0_2 = arith.constant 0 : index
    %13 = vector.load %arg2[%c0_1, %c0_2] : memref<48x128xf32, #tpu.memory_space<vmem>>, vector<8x128xf32>
    tpu.vector_store %arg2[%c0_1, %c0_2], %12 {strides = array<i32>} : memref<48x128xf32, #tpu.memory_space<vmem>>, vector<8x128xf32>,
    %14 = math.cos %11 : vector<8x128xf32>
    %c24 = arith.constant 24 : index
    %c0_3 = arith.constant 0 : index
    %15 = vector.load %arg2[%c24, %c0_3] : memref<48x128xf32, #tpu.memory_space<vmem>>, vector<8x128xf32>
    tpu.vector_store %arg2[%c24, %c0_3], %14 {strides = array<i32>} : memref<48x128xf32, #tpu.memory_space<vmem>>, vector<8x128xf32>,
    %c1 = arith.constant 1 : index
    %c0_4 = arith.constant 0 : index
    %16 = vector.load %arg1[%c1, %c0_4] : memref<3x128xf32, #tpu.memory_space<vmem>>, vector<1x128xf32>
    %17 = vector.broadcast %16 : vector<1x128xf32> to vector<8x128xf32>
    %18 = vector.broadcast %7 : vector<8x1xf32> to vector<8x128xf32>
    %19 = arith.mulf %17, %18 : vector<8x128xf32>
    %20 = math.sin %19 : vector<8x128xf32>
    %c8 = arith.constant 8 : index
    %c0_5 = arith.constant 0 : index
    %21 = vector.load %arg2[%c8, %c0_5] : memref<48x128xf32, #tpu.memory_space<vmem>>, vector<8x128xf32>
    tpu.vector_store %arg2[%c8, %c0_5], %20 {strides = array<i32>} : memref<48x128xf32, #tpu.memory_space<vmem>>, vector<8x128xf32>,
    %22 = math.cos %19 : vector<8x128xf32>
    %c32 = arith.constant 32 : index
    %c0_6 = arith.constant 0 : index
    %23 = vector.load %arg2[%c32, %c0_6] : memref<48x128xf32, #tpu.memory_space<vmem>>, vector<8x128xf32>
    tpu.vector_store %arg2[%c32, %c0_6], %22 {strides = array<i32>} : memref<48x128xf32, #tpu.memory_space<vmem>>, vector<8x128xf32>,
    %c2 = arith.constant 2 : index
    %c0_7 = arith.constant 0 : index
    %24 = vector.load %arg1[%c2, %c0_7] : memref<3x128xf32, #tpu.memory_space<vmem>>, vector<1x128xf32>
    %25 = vector.broadcast %24 : vector<1x128xf32> to vector<8x128xf32>
    %26 = vector.broadcast %7 : vector<8x1xf32> to vector<8x128xf32>
    %27 = arith.mulf %25, %26 : vector<8x128xf32>
    %28 = math.sin %27 : vector<8x128xf32>
    %c16 = arith.constant 16 : index
    %c0_8 = arith.constant 0 : index
    %29 = vector.load %arg2[%c16, %c0_8] : memref<48x128xf32, #tpu.memory_space<vmem>>, vector<8x128xf32>
    tpu.vector_store %arg2[%c16, %c0_8], %28 {strides = array<i32>} : memref<48x128xf32, #tpu.memory_space<vmem>>, vector<8x128xf32>,
    %30 = math.cos %27 : vector<8x128xf32>
    %c40 = arith.constant 40 : index
    %c0_9 = arith.constant 0 : index
    %31 = vector.load %arg2[%c40, %c0_9] : memref<48x128xf32, #tpu.memory_space<vmem>>, vector<8x128xf32>
    tpu.vector_store %arg2[%c40, %c0_9], %30 {strides = array<i32>} : memref<48x128xf32, #tpu.memory_space<vmem>>, vector<8x128xf32>,
    return
  }
  func.func @transform_0(%arg0: i32) -> (i32, i32) {
    %c0_i32 = arith.constant 0 : i32
    %c0_i32_0 = arith.constant 0 : i32
    return %c0_i32, %arg0 : i32, i32
  }
  func.func @transform_1(%arg0: i32) -> (i32, i32) {
    %c0_i32 = arith.constant 0 : i32
    %c0_i32_0 = arith.constant 0 : i32
    return %c0_i32, %arg0 : i32, i32
  }
}

</mosaic_0001>

<llo_original>
// kernel: tpu_custom_call.1
$region0: #{tpu_custom_call.1}
  #allocation0 [shape = 'u32[]', space=smem, size = 0x4, offset = 0x4, fixed_abs, tag = 'smem constant byte address 0x4 - core index']
  #allocation1 [shape = 'u32[144,128]{1,0:T(1,128)}', space=vmem, size = 0x12000, scoped, tag = 'internal scratch']
  %s0 = inlined_call_operand.hbm [shape: f32[3,128], index: 0, kind: input, shape index: {}]
  %s1 = inlined_call_operand.hbm [shape: f32[48,128], index: 1, kind: output, shape index: {}]
  %s2 = sld [smem:[#allocation0]]
  $region18: #{tpu_custom_call.1} parent=0
    _
  %s4 = ssub.s32 1, %s2
  %s5 = scalar_select 0, %s4, %s2
  $region1: #{tpu_custom_call.1} parent=0
    #allocation2 [shape = 'u8[2048]{0}', space=vmem, size = 0x800, scoped, tag = 'input window, operand 0, single buffered']
    #allocation3 [shape = 's32[1]{0}', space=sflag, size = 0x4, scoped, tag = 'scoped memory for tpu_custom_call.1']
    #allocation4 [shape = 's32[1]{0}', space=sflag, size = 0x4, scoped, tag = 'scoped memory for tpu_custom_call.1']
    #allocation5 [shape = 'u8[24576]{0}', space=vmem, size = 0x6000, scoped, tag = 'output window, operand 0, single buffered']
    %6 = vsyncpa [#allocation3], 0
    %7 = vsyncpa [#allocation4], 0
    // Predicated region
    $region2: #{tpu_custom_call.1} parent=1 // pred_check
      _
    $region3: #{tpu_custom_call.1} parent=1 // pred_check_branch
      %9 = sbr.rel (0) target = $region5
    $region4: #{tpu_custom_call.1} parent=1 // pred_region
      %s11 = ssub.s32 64, 64
      %12 = vsyncadd [#allocation3], %s11
      %s14 = sshll.u32 [#allocation2], 4
      %s15 = int_to_ptr.vmem [resolvable:$true] %s14
      %17 = dma.hbm_to_vmem [thread:$0]  %s0, 64, %s15, [#allocation3]
    $region5: #{tpu_custom_call.1} parent=1 // pred_fallthru
      _
    // Predicated region
    $region6: #{tpu_custom_call.1} parent=1 // pred_check
      _
    $region7: #{tpu_custom_call.1} parent=1 // pred_check_branch
      %19 = sbr.rel (0) target = $region9
    $region8: #{tpu_custom_call.1} parent=1 // pred_region
      %20 = dma.done [#allocation3], 64
    $region9: #{tpu_custom_call.1} parent=1 // pred_fallthru
      _
    %v21 = vlaneseq
    %v22 = vshrl.u32 %v21, 7
    %v23 = vadd.s32 %v22, 127
    %v24 = vshll.u32 %v23, 23
    %v26 = vmul.f32 %v24, 3.1415927
    %v27 = vld [vmem:[#allocation2] sm:$0x1]
    %v28 = vlaneseq
    %v29 = vshrl.u32 %v28, 7
    %v30 = vsub.s32 0, %v29
    %v31 = vrot.slane %v27, %v30
    %v32 = vmul.f32 %v31, %v26
    %v33 = vand.u32 2147483647, %v32
    %vm34 = vcmp.le.f32.partialorder %v33, 0.7853982
    %vm35 = vcmp.lt.s32.totalorder %v32, 0
    %v36 = vand.u32 %v32, 2139095040
    %v37 = vshrl.u32 %v36, 23
    %v38 = vsub.s32 %v37, 127
    %v39 = vand.u32 2147483647, %v32
    %v40 = vand.u32 %v39, 8388607
    %v41 = vor.u32 %v40, 8388608
    %v42 = vsub.s32 0, %v41
    %v43 = vadd.s32 %v38, 1
    %vm44 = vcmp.gt.s32.totalorder %v43, 0
    %v45 = vsel %vm44, %v43, 0
    %v46 = vshrl.u32 %v45, 5
    %v47 = vand.u32 %v45, 31
    %v48 = vsub.s32 32, %v47
    %v49 = vshrl.u32 683565275, %v48
    %v50 = vshll.u32 683565275, %v47
    %v51 = vshrl.u32 2475754826, %v48
    %v52 = vor.u32 %v50, %v51
    %v53 = vshll.u32 2475754826, %v47
    %v54 = vshrl.u32 2131351028, %v48
    %v55 = vor.u32 %v53, %v54
    %v56 = vshll.u32 2131351028, %v47
    %v57 = vshrl.u32 2102212464, %v48
    %v58 = vor.u32 %v56, %v57
    %v59 = vshll.u32 2102212464, %v47
    %v60 = vshrl.u32 920167782, %v48
    %v61 = vor.u32 %v59, %v60
    %v62 = vshll.u32 920167782, %v47
    %v63 = vshrl.u32 1326507024, %v48
    %v64 = vor.u32 %v62, %v63
    %vm65 = vcmp.lt.s32.totalorder %v46, 1
    %vm66 = vcmp.lt.s32.totalorder %v46, 2
    %vm67 = vcmp.lt.s32.totalorder %v46, 3
    %vm68 = vcmp.lt.s32.totalorder %v46, 4
    %v69 = vsel %vm65, %v49, %v52
    %v70 = vsel %vm68, %v58, 2102212464
    %v71 = vsel %vm67, %v55, %v70
    %v72 = vsel %vm66, %v69, %v71
    %v73 = vsel %vm65, %v52, %v55
    %v74 = vsel %vm68, %v61, 920167782
    %v75 = vsel %vm67, %v58, %v74
    %v76 = vsel %vm66, %v73, %v75
    %v77 = vsel %vm65, %v55, %v58
    %v78 = vsel %vm68, %v64, 1326507024
    %v79 = vsel %vm67, %v61, %v78
    %v80 = vsel %vm66, %v77, %v79
    %v81 = vshll.u32 %v41, 8
    %v82 = vmul.u32.u64.compose %v81, %v80
    %v83 = vextract.low.u32 %v82
    %v84 = vextract.high.u32 %v82
    %v85 = vmul.u32.u64.compose %v81, %v76
    %v86 = vextract.low.u32 %v85
    %v87 = vextract.high.u32 %v85
    %v88 = vmul.u32 %v81, %v72
    %v89 = vadd.s32 %v84, %v86
    %vm90 = vc.u32 %v84, %v86
    %v91 = vadd.s32 %v87, 1
    %v92 = vsel %vm90, %v91, %v87
    %v93 = vadd.s32 %v88, %v92
    %v94 = vadd.s32 %v93, 536870912
    %v95 = vshrl.u32 %v94, 30
    %v96 = vshll.u32 %v95, 30
    %v97 = vsub.s32 %v93, %v96
    %vm98 = vcmp.lt.s32.totalorder %v97, 0
    %v99 = vsub.s32 0, %v97
    %v100 = vsel %vm98, %v99, %v97
    %v101 = vclz %v100
    %v102 = vsub.s32 %v101, 2
    %vm103 = vcmp.gt.s32.totalorder 0, %v102
    %v104 = vsel %vm103, 0, %v102
    %v105 = vsub.s32 32, %v104
    %v106 = vshll.u32 %v97, %v104
    %v107 = vshrl.u32 %v89, %v105
    %v108 = vor.u32 %v106, %v107
    %v109 = vsub.s32 4294967266, %v104
    %v110 = vadd.s32 %v109, 127
    %v111 = vshll.u32 %v110, 23
    %v112 = vor.u32 4788187, %v111
    %v113 = vand.u32 2147483647, %v112
    %v115 = vcvt.s32.f32 %v108
    %v116 = vmul.f32 %v115, %v113
    %v117 = vxor.u32 %v116, 2147483648
    %v118 = vsel %vm35, %v117, %v116
    %v119 = vsub.s32 4, %v95
    %v120 = vsel %vm35, %v119, %v95
    %v121 = vsel %vm34, %v32, %v118
    %v122 = vsel %vm34, 0, %v120
    %v123 = vcosq.f32.pop %v121
    %v124 = vsinq.f32.pop %v121
    %vm125 = vweird.f32 %v32
    %v126 = vadd.s32 %v122, 3
    %v127 = vand.u32 %v126, 3
    %vm128 = vcmp.lt.s32.totalorder %v127, 2
    %vm129 = vcmp.eq.s32.totalorder %v127, 0
    %v130 = vxor.u32 %v124, 2147483648
    %v131 = vsel %vm129, %v123, %v130
    %vm132 = vcmp.eq.s32.totalorder %v127, 2
    %v133 = vxor.u32 %v123, 2147483648
    %v134 = vsel %vm132, %v133, %v124
    %v135 = vsel %vm128, %v131, %v134
    %v136 = vsel %vm125, nan, %v135
    %137 = vst [vmem:[#allocation5] sm:$0xff] %v136
    %v138 = vand.u32 2147483647, %v32
    %vm139 = vcmp.le.f32.partialorder %v138, 0.7853982
    %vm140 = vcmp.lt.s32.totalorder %v32, 0
    %v141 = vand.u32 %v32, 2139095040
    %v142 = vshrl.u32 %v141, 23
    %v143 = vsub.s32 %v142, 127
    %v144 = vand.u32 2147483647, %v32
    %v145 = vand.u32 %v144, 8388607
    %v146 = vor.u32 %v145, 8388608
    %v147 = vsub.s32 0, %v146
    %v148 = vadd.s32 %v143, 1
    %vm149 = vcmp.gt.s32.totalorder %v148, 0
    %v150 = vsel %vm149, %v148, 0
    %v151 = vshrl.u32 %v150, 5
    %v152 = vand.u32 %v150, 31
    %v153 = vsub.s32 32, %v152
    %v154 = vshrl.u32 683565275, %v153
    %v155 = vshll.u32 683565275, %v152
    %v156 = vshrl.u32 2475754826, %v153
    %v157 = vor.u32 %v155, %v156
    %v158 = vshll.u32 2475754826, %v152
    %v159 = vshrl.u32 2131351028, %v153
    %v160 = vor.u32 %v158, %v159
    %v161 = vshll.u32 2131351028, %v152
    %v162 = vshrl.u32 2102212464, %v153
    %v163 = vor.u32 %v161, %v162
    %v164 = vshll.u32 2102212464, %v152
    %v165 = vshrl.u32 920167782, %v153
    %v166 = vor.u32 %v164, %v165
    %v167 = vshll.u32 920167782, %v152
    %v168 = vshrl.u32 1326507024, %v153
    %v169 = vor.u32 %v167, %v168
    %vm170 = vcmp.lt.s32.totalorder %v151, 1
    %vm171 = vcmp.lt.s32.totalorder %v151, 2
    %vm172 = vcmp.lt.s32.totalorder %v151, 3
    %vm173 = vcmp.lt.s32.totalorder %v151, 4
    %v174 = vsel %vm170, %v154, %v157
    %v175 = vsel %vm173, %v163, 2102212464
    %v176 = vsel %vm172, %v160, %v175
    %v177 = vsel %vm171, %v174, %v176
    %v178 = vsel %vm170, %v157, %v160
    %v179 = vsel %vm173, %v166, 920167782
    %v180 = vsel %vm172, %v163, %v179
    %v181 = vsel %vm171, %v178, %v180
    %v182 = vsel %vm170, %v160, %v163
    %v183 = vsel %vm173, %v169, 1326507024
    %v184 = vsel %vm172, %v166, %v183
    %v185 = vsel %vm171, %v182, %v184
    %v186 = vshll.u32 %v146, 8
    %v187 = vmul.u32.u64.compose %v186, %v185
    %v188 = vextract.low.u32 %v187
    %v189 = vextract.high.u32 %v187
    %v190 = vmul.u32.u64.compose %v186, %v181
    %v191 = vextract.low.u32 %v190
    %v192 = vextract.high.u32 %v190
    %v193 = vmul.u32 %v186, %v177
    %v194 = vadd.s32 %v189, %v191
    %vm195 = vc.u32 %v189, %v191
    %v196 = vadd.s32 %v192, 1
    %v197 = vsel %vm195, %v196, %v192
    %v198 = vadd.s32 %v193, %v197
    %v199 = vadd.s32 %v198, 536870912
    %v200 = vshrl.u32 %v199, 30
    %v201 = vshll.u32 %v200, 30
    %v202 = vsub.s32 %v198, %v201
    %vm203 = vcmp.lt.s32.totalorder %v202, 0
    %v204 = vsub.s32 0, %v202
    %v205 = vsel %vm203, %v204, %v202
    %v206 = vclz %v205
    %v207 = vsub.s32 %v206, 2
    %vm208 = vcmp.gt.s32.totalorder 0, %v207
    %v209 = vsel %vm208, 0, %v207
    %v210 = vsub.s32 32, %v209
    %v211 = vshll.u32 %v202, %v209
    %v212 = vshrl.u32 %v194, %v210
    %v213 = vor.u32 %v211, %v212
    %v214 = vsub.s32 4294967266, %v209
    %v215 = vadd.s32 %v214, 127
    %v216 = vshll.u32 %v215, 23
    %v217 = vor.u32 4788187, %v216
    %v218 = vand.u32 2147483647, %v217
    %v220 = vcvt.s32.f32 %v213
    %v221 = vmul.f32 %v220, %v218
    %v222 = vxor.u32 %v221, 2147483648
    %v223 = vsel %vm140, %v222, %v221
    %v224 = vsub.s32 4, %v200
    %v225 = vsel %vm140, %v224, %v200
    %v226 = vsel %vm139, %v32, %v223
    %v227 = vsel %vm139, 0, %v225
    %v228 = vcosq.f32.pop %v226
    %v229 = vsinq.f32.pop %v226
    %vm230 = vweird.f32 %v32
    %v231 = vand.u32 %v227, 3
    %vm232 = vcmp.lt.s32.totalorder %v231, 2
    %vm233 = vcmp.eq.s32.totalorder %v231, 0
    %v234 = vxor.u32 %v229, 2147483648
    %v235 = vsel %vm233, %v228, %v234
    %vm236 = vcmp.eq.s32.totalorder %v231, 2
    %v237 = vxor.u32 %v228, 2147483648
    %v238 = vsel %vm236, %v237, %v229
    %v239 = vsel %vm232, %v235, %v238
    %v240 = vsel %vm230, nan, %v239
    %241 = vst [vmem:[#allocation5 + $0x18] sm:$0xff] %v240
    %v242 = vld [vmem:[#allocation2 + $0x1] sm:$0x1]
    %v243 = vlaneseq
    %v244 = vshrl.u32 %v243, 7
    %v245 = vsub.s32 0, %v244
    %v246 = vrot.slane %v242, %v245
    %v247 = vmul.f32 %v246, %v26
    %v248 = vand.u32 2147483647, %v247
    %vm249 = vcmp.le.f32.partialorder %v248, 0.7853982
    %vm250 = vcmp.lt.s32.totalorder %v247, 0
    %v251 = vand.u32 %v247, 2139095040
    %v252 = vshrl.u32 %v251, 23
    %v253 = vsub.s32 %v252, 127
    %v254 = vand.u32 2147483647, %v247
    %v255 = vand.u32 %v254, 8388607
    %v256 = vor.u32 %v255, 8388608
    %v257 = vsub.s32 0, %v256
    %v258 = vadd.s32 %v253, 1
    %vm259 = vcmp.gt.s32.totalorder %v258, 0
    %v260 = vsel %vm259, %v258, 0
    %v261 = vshrl.u32 %v260, 5
    %v262 = vand.u32 %v260, 31
    %v263 = vsub.s32 32, %v262
    %v264 = vshrl.u32 683565275, %v263
    %v265 = vshll.u32 683565275, %v262
    %v266 = vshrl.u32 2475754826, %v263
    %v267 = vor.u32 %v265, %v266
    %v268 = vshll.u32 2475754826, %v262
    %v269 = vshrl.u32 2131351028, %v263
    %v270 = vor.u32 %v268, %v269
    %v271 = vshll.u32 2131351028, %v262
    %v272 = vshrl.u32 2102212464, %v263
    %v273 = vor.u32 %v271, %v272
    %v274 = vshll.u32 2102212464, %v262
    %v275 = vshrl.u32 920167782, %v263
    %v276 = vor.u32 %v274, %v275
    %v277 = vshll.u32 920167782, %v262
    %v278 = vshrl.u32 1326507024, %v263
    %v279 = vor.u32 %v277, %v278
    %vm280 = vcmp.lt.s32.totalorder %v261, 1
    %vm281 = vcmp.lt.s32.totalorder %v261, 2
    %vm282 = vcmp.lt.s32.totalorder %v261, 3
    %vm283 = vcmp.lt.s32.totalorder %v261, 4
    %v284 = vsel %vm280, %v264, %v267
    %v285 = vsel %vm283, %v273, 2102212464
    %v286 = vsel %vm282, %v270, %v285
    %v287 = vsel %vm281, %v284, %v286
    %v288 = vsel %vm280, %v267, %v270
    %v289 = vsel %vm283, %v276, 920167782
    %v290 = vsel %vm282, %v273, %v289
    %v291 = vsel %vm281, %v288, %v290
    %v292 = vsel %vm280, %v270, %v273
    %v293 = vsel %vm283, %v279, 1326507024
    %v294 = vsel %vm282, %v276, %v293
    %v295 = vsel %vm281, %v292, %v294
    %v296 = vshll.u32 %v256, 8
    %v297 = vmul.u32.u64.compose %v296, %v295
    %v298 = vextract.low.u32 %v297
    %v299 = vextract.high.u32 %v297
    %v300 = vmul.u32.u64.compose %v296, %v291
    %v301 = vextract.low.u32 %v300
    %v302 = vextract.high.u32 %v300
    %v303 = vmul.u32 %v296, %v287
    %v304 = vadd.s32 %v299, %v301
    %vm305 = vc.u32 %v299, %v301
    %v306 = vadd.s32 %v302, 1
    %v307 = vsel %vm305, %v306, %v302
    %v308 = vadd.s32 %v303, %v307
    %v309 = vadd.s32 %v308, 536870912
    %v310 = vshrl.u32 %v309, 30
    %v311 = vshll.u32 %v310, 30
    %v312 = vsub.s32 %v308, %v311
    %vm313 = vcmp.lt.s32.totalorder %v312, 0
    %v314 = vsub.s32 0, %v312
    %v315 = vsel %vm313, %v314, %v312
    %v316 = vclz %v315
    %v317 = vsub.s32 %v316, 2
    %vm318 = vcmp.gt.s32.totalorder 0, %v317
    %v319 = vsel %vm318, 0, %v317
    %v320 = vsub.s32 32, %v319
    %v321 = vshll.u32 %v312, %v319
    %v322 = vshrl.u32 %v304, %v320
    %v323 = vor.u32 %v321, %v322
    %v324 = vsub.s32 4294967266, %v319
    %v325 = vadd.s32 %v324, 127
    %v326 = vshll.u32 %v325, 23
    %v327 = vor.u32 4788187, %v326
    %v328 = vand.u32 2147483647, %v327
    %v330 = vcvt.s32.f32 %v323
    %v331 = vmul.f32 %v330, %v328
    %v332 = vxor.u32 %v331, 2147483648
    %v333 = vsel %vm250, %v332, %v331
    %v334 = vsub.s32 4, %v310
    %v335 = vsel %vm250, %v334, %v310
    %v336 = vsel %vm249, %v247, %v333
    %v337 = vsel %vm249, 0, %v335
    %v338 = vcosq.f32.pop %v336
    %v339 = vsinq.f32.pop %v336
    %vm340 = vweird.f32 %v247
    %v341 = vadd.s32 %v337, 3
    %v342 = vand.u32 %v341, 3
    %vm343 = vcmp.lt.s32.totalorder %v342, 2
    %vm344 = vcmp.eq.s32.totalorder %v342, 0
    %v345 = vxor.u32 %v339, 2147483648
    %v346 = vsel %vm344, %v338, %v345
    %vm347 = vcmp.eq.s32.totalorder %v342, 2
    %v348 = vxor.u32 %v338, 2147483648
    %v349 = vsel %vm347, %v348, %v339
    %v350 = vsel %vm343, %v346, %v349
    %v351 = vsel %vm340, nan, %v350
    %352 = vst [vmem:[#allocation5 + $0x8] sm:$0xff] %v351
    %v353 = vand.u32 2147483647, %v247
    %vm354 = vcmp.le.f32.partialorder %v353, 0.7853982
    %vm355 = vcmp.lt.s32.totalorder %v247, 0
    %v356 = vand.u32 %v247, 2139095040
    %v357 = vshrl.u32 %v356, 23
    %v358 = vsub.s32 %v357, 127
    %v359 = vand.u32 2147483647, %v247
    %v360 = vand.u32 %v359, 8388607
    %v361 = vor.u32 %v360, 8388608
    %v362 = vsub.s32 0, %v361
    %v363 = vadd.s32 %v358, 1
    %vm364 = vcmp.gt.s32.totalorder %v363, 0
    %v365 = vsel %vm364, %v363, 0
    %v366 = vshrl.u32 %v365, 5
    %v367 = vand.u32 %v365, 31
    %v368 = vsub.s32 32, %v367
    %v369 = vshrl.u32 683565275, %v368
    %v370 = vshll.u32 683565275, %v367
    %v371 = vshrl.u32 2475754826, %v368
    %v372 = vor.u32 %v370, %v371
    %v373 = vshll.u32 2475754826, %v367
    %v374 = vshrl.u32 2131351028, %v368
    %v375 = vor.u32 %v373, %v374
    %v376 = vshll.u32 2131351028, %v367
    %v377 = vshrl.u32 2102212464, %v368
    %v378 = vor.u32 %v376, %v377
    %v379 = vshll.u32 2102212464, %v367
    %v380 = vshrl.u32 920167782, %v368
    %v381 = vor.u32 %v379, %v380
    %v382 = vshll.u32 920167782, %v367
    %v383 = vshrl.u32 1326507024, %v368
    %v384 = vor.u32 %v382, %v383
    %vm385 = vcmp.lt.s32.totalorder %v366, 1
    %vm386 = vcmp.lt.s32.totalorder %v366, 2
    %vm387 = vcmp.lt.s32.totalorder %v366, 3
    %vm388 = vcmp.lt.s32.totalorder %v366, 4
    %v389 = vsel %vm385, %v369, %v372
    %v390 = vsel %vm388, %v378, 2102212464
    %v391 = vsel %vm387, %v375, %v390
    %v392 = vsel %vm386, %v389, %v391
    %v393 = vsel %vm385, %v372, %v375
    %v394 = vsel %vm388, %v381, 920167782
    %v395 = vsel %vm387, %v378, %v394
    %v396 = vsel %vm386, %v393, %v395
    %v397 = vsel %vm385, %v375, %v378
    %v398 = vsel %vm388, %v384, 1326507024
    %v399 = vsel %vm387, %v381, %v398
    %v400 = vsel %vm386, %v397, %v399
    %v401 = vshll.u32 %v361, 8
    %v402 = vmul.u32.u64.compose %v401, %v400
    %v403 = vextract.low.u32 %v402
    %v404 = vextract.high.u32 %v402
    %v405 = vmul.u32.u64.compose %v401, %v396
    %v406 = vextract.low.u32 %v405
    %v407 = vextract.high.u32 %v405
    %v408 = vmul.u32 %v401, %v392
    %v409 = vadd.s32 %v404, %v406
    %vm410 = vc.u32 %v404, %v406
    %v411 = vadd.s32 %v407, 1
    %v412 = vsel %vm410, %v411, %v407
    %v413 = vadd.s32 %v408, %v412
    %v414 = vadd.s32 %v413, 536870912
    %v415 = vshrl.u32 %v414, 30
    %v416 = vshll.u32 %v415, 30
    %v417 = vsub.s32 %v413, %v416
    %vm418 = vcmp.lt.s32.totalorder %v417, 0
    %v419 = vsub.s32 0, %v417
    %v420 = vsel %vm418, %v419, %v417
    %v421 = vclz %v420
    %v422 = vsub.s32 %v421, 2
    %vm423 = vcmp.gt.s32.totalorder 0, %v422
    %v424 = vsel %vm423, 0, %v422
    %v425 = vsub.s32 32, %v424
    %v426 = vshll.u32 %v417, %v424
    %v427 = vshrl.u32 %v409, %v425
    %v428 = vor.u32 %v426, %v427
    %v429 = vsub.s32 4294967266, %v424
    %v430 = vadd.s32 %v429, 127
    %v431 = vshll.u32 %v430, 23
    %v432 = vor.u32 4788187, %v431
    %v433 = vand.u32 2147483647, %v432
    %v435 = vcvt.s32.f32 %v428
    %v436 = vmul.f32 %v435, %v433
    %v437 = vxor.u32 %v436, 2147483648
    %v438 = vsel %vm355, %v437, %v436
    %v439 = vsub.s32 4, %v415
    %v440 = vsel %vm355, %v439, %v415
    %v441 = vsel %vm354, %v247, %v438
    %v442 = vsel %vm354, 0, %v440
    %v443 = vcosq.f32.pop %v441
    %v444 = vsinq.f32.pop %v441
    %vm445 = vweird.f32 %v247
    %v446 = vand.u32 %v442, 3
    %vm447 = vcmp.lt.s32.totalorder %v446, 2
    %vm448 = vcmp.eq.s32.totalorder %v446, 0
    %v449 = vxor.u32 %v444, 2147483648
    %v450 = vsel %vm448, %v443, %v449
    %vm451 = vcmp.eq.s32.totalorder %v446, 2
    %v452 = vxor.u32 %v443, 2147483648
    %v453 = vsel %vm451, %v452, %v444
    %v454 = vsel %vm447, %v450, %v453
    %v455 = vsel %vm445, nan, %v454
    %456 = vst [vmem:[#allocation5 + $0x20] sm:$0xff] %v455
    %v457 = vld [vmem:[#allocation2 + $0x2] sm:$0x1]
    %v458 = vlaneseq
    %v459 = vshrl.u32 %v458, 7
    %v460 = vsub.s32 0, %v459
    %v461 = vrot.slane %v457, %v460
    %v462 = vmul.f32 %v461, %v26
    %v463 = vand.u32 2147483647, %v462
    %vm464 = vcmp.le.f32.partialorder %v463, 0.7853982
    %vm465 = vcmp.lt.s32.totalorder %v462, 0
    %v466 = vand.u32 %v462, 2139095040
    %v467 = vshrl.u32 %v466, 23
    %v468 = vsub.s32 %v467, 127
    %v469 = vand.u32 2147483647, %v462
    %v470 = vand.u32 %v469, 8388607
    %v471 = vor.u32 %v470, 8388608
    %v472 = vsub.s32 0, %v471
    %v473 = vadd.s32 %v468, 1
    %vm474 = vcmp.gt.s32.totalorder %v473, 0
    %v475 = vsel %vm474, %v473, 0
    %v476 = vshrl.u32 %v475, 5
    %v477 = vand.u32 %v475, 31
    %v478 = vsub.s32 32, %v477
    %v479 = vshrl.u32 683565275, %v478
    %v480 = vshll.u32 683565275, %v477
    %v481 = vshrl.u32 2475754826, %v478
    %v482 = vor.u32 %v480, %v481
    %v483 = vshll.u32 2475754826, %v477
    %v484 = vshrl.u32 2131351028, %v478
    %v485 = vor.u32 %v483, %v484
    %v486 = vshll.u32 2131351028, %v477
    %v487 = vshrl.u32 2102212464, %v478
    %v488 = vor.u32 %v486, %v487
    %v489 = vshll.u32 2102212464, %v477
    %v490 = vshrl.u32 920167782, %v478
    %v491 = vor.u32 %v489, %v490
    %v492 = vshll.u32 920167782, %v477
    %v493 = vshrl.u32 1326507024, %v478
    %v494 = vor.u32 %v492, %v493
    %vm495 = vcmp.lt.s32.totalorder %v476, 1
    %vm496 = vcmp.lt.s32.totalorder %v476, 2
    %vm497 = vcmp.lt.s32.totalorder %v476, 3
    %vm498 = vcmp.lt.s32.totalorder %v476, 4
    %v499 = vsel %vm495, %v479, %v482
    %v500 = vsel %vm498, %v488, 2102212464
    %v501 = vsel %vm497, %v485, %v500
    %v502 = vsel %vm496, %v499, %v501
    %v503 = vsel %vm495, %v482, %v485
    %v504 = vsel %vm498, %v491, 920167782
    %v505 = vsel %vm497, %v488, %v504
    %v506 = vsel %vm496, %v503, %v505
    %v507 = vsel %vm495, %v485, %v488
    %v508 = vsel %vm498, %v494, 1326507024
    %v509 = vsel %vm497, %v491, %v508
    %v510 = vsel %vm496, %v507, %v509
    %v511 = vshll.u32 %v471, 8
    %v512 = vmul.u32.u64.compose %v511, %v510
    %v513 = vextract.low.u32 %v512
    %v514 = vextract.high.u32 %v512
    %v515 = vmul.u32.u64.compose %v511, %v506
    %v516 = vextract.low.u32 %v515
    %v517 = vextract.high.u32 %v515
    %v518 = vmul.u32 %v511, %v502
    %v519 = vadd.s32 %v514, %v516
    %vm520 = vc.u32 %v514, %v516
    %v521 = vadd.s32 %v517, 1
    %v522 = vsel %vm520, %v521, %v517
    %v523 = vadd.s32 %v518, %v522
    %v524 = vadd.s32 %v523, 536870912
    %v525 = vshrl.u32 %v524, 30
    %v526 = vshll.u32 %v525, 30
    %v527 = vsub.s32 %v523, %v526
    %vm528 = vcmp.lt.s32.totalorder %v527, 0
    %v529 = vsub.s32 0, %v527
    %v530 = vsel %vm528, %v529, %v527
    %v531 = vclz %v530
    %v532 = vsub.s32 %v531, 2
    %vm533 = vcmp.gt.s32.totalorder 0, %v532
    %v534 = vsel %vm533, 0, %v532
    %v535 = vsub.s32 32, %v534
    %v536 = vshll.u32 %v527, %v534
    %v537 = vshrl.u32 %v519, %v535
    %v538 = vor.u32 %v536, %v537
    %v539 = vsub.s32 4294967266, %v534
    %v540 = vadd.s32 %v539, 127
    %v541 = vshll.u32 %v540, 23
    %v542 = vor.u32 4788187, %v541
    %v543 = vand.u32 2147483647, %v542
    %v545 = vcvt.s32.f32 %v538
    %v546 = vmul.f32 %v545, %v543
    %v547 = vxor.u32 %v546, 2147483648
    %v548 = vsel %vm465, %v547, %v546
    %v549 = vsub.s32 4, %v525
    %v550 = vsel %vm465, %v549, %v525
    %v551 = vsel %vm464, %v462, %v548
    %v552 = vsel %vm464, 0, %v550
    %v553 = vcosq.f32.pop %v551
    %v554 = vsinq.f32.pop %v551
    %vm555 = vweird.f32 %v462
    %v556 = vadd.s32 %v552, 3
    %v557 = vand.u32 %v556, 3
    %vm558 = vcmp.lt.s32.totalorder %v557, 2
    %vm559 = vcmp.eq.s32.totalorder %v557, 0
    %v560 = vxor.u32 %v554, 2147483648
    %v561 = vsel %vm559, %v553, %v560
    %vm562 = vcmp.eq.s32.totalorder %v557, 2
    %v563 = vxor.u32 %v553, 2147483648
    %v564 = vsel %vm562, %v563, %v554
    %v565 = vsel %vm558, %v561, %v564
    %v566 = vsel %vm555, nan, %v565
    %567 = vst [vmem:[#allocation5 + $0x10] sm:$0xff] %v566
    %v568 = vand.u32 2147483647, %v462
    %vm569 = vcmp.le.f32.partialorder %v568, 0.7853982
    %vm570 = vcmp.lt.s32.totalorder %v462, 0
    %v571 = vand.u32 %v462, 2139095040
    %v572 = vshrl.u32 %v571, 23
    %v573 = vsub.s32 %v572, 127
    %v574 = vand.u32 2147483647, %v462
    %v575 = vand.u32 %v574, 8388607
    %v576 = vor.u32 %v575, 8388608
    %v577 = vsub.s32 0, %v576
    %v578 = vadd.s32 %v573, 1
    %vm579 = vcmp.gt.s32.totalorder %v578, 0
    %v580 = vsel %vm579, %v578, 0
    %v581 = vshrl.u32 %v580, 5
    %v582 = vand.u32 %v580, 31
    %v583 = vsub.s32 32, %v582
    %v584 = vshrl.u32 683565275, %v583
    %v585 = vshll.u32 683565275, %v582
    %v586 = vshrl.u32 2475754826, %v583
    %v587 = vor.u32 %v585, %v586
    %v588 = vshll.u32 2475754826, %v582
    %v589 = vshrl.u32 2131351028, %v583
    %v590 = vor.u32 %v588, %v589
    %v591 = vshll.u32 2131351028, %v582
    %v592 = vshrl.u32 2102212464, %v583
    %v593 = vor.u32 %v591, %v592
    %v594 = vshll.u32 2102212464, %v582
    %v595 = vshrl.u32 920167782, %v583
    %v596 = vor.u32 %v594, %v595
    %v597 = vshll.u32 920167782, %v582
    %v598 = vshrl.u32 1326507024, %v583
    %v599 = vor.u32 %v597, %v598
    %vm600 = vcmp.lt.s32.totalorder %v581, 1
    %vm601 = vcmp.lt.s32.totalorder %v581, 2
    %vm602 = vcmp.lt.s32.totalorder %v581, 3
    %vm603 = vcmp.lt.s32.totalorder %v581, 4
    %v604 = vsel %vm600, %v584, %v587
    %v605 = vsel %vm603, %v593, 2102212464
    %v606 = vsel %vm602, %v590, %v605
    %v607 = vsel %vm601, %v604, %v606
    %v608 = vsel %vm600, %v587, %v590
    %v609 = vsel %vm603, %v596, 920167782
    %v610 = vsel %vm602, %v593, %v609
    %v611 = vsel %vm601, %v608, %v610
    %v612 = vsel %vm600, %v590, %v593
    %v613 = vsel %vm603, %v599, 1326507024
    %v614 = vsel %vm602, %v596, %v613
    %v615 = vsel %vm601, %v612, %v614
    %v616 = vshll.u32 %v576, 8
    %v617 = vmul.u32.u64.compose %v616, %v615
    %v618 = vextract.low.u32 %v617
    %v619 = vextract.high.u32 %v617
    %v620 = vmul.u32.u64.compose %v616, %v611
    %v621 = vextract.low.u32 %v620
    %v622 = vextract.high.u32 %v620
    %v623 = vmul.u32 %v616, %v607
    %v624 = vadd.s32 %v619, %v621
    %vm625 = vc.u32 %v619, %v621
    %v626 = vadd.s32 %v622, 1
    %v627 = vsel %vm625, %v626, %v622
    %v628 = vadd.s32 %v623, %v627
    %v629 = vadd.s32 %v628, 536870912
    %v630 = vshrl.u32 %v629, 30
    %v631 = vshll.u32 %v630, 30
    %v632 = vsub.s32 %v628, %v631
    %vm633 = vcmp.lt.s32.totalorder %v632, 0
    %v634 = vsub.s32 0, %v632
    %v635 = vsel %vm633, %v634, %v632
    %v636 = vclz %v635
    %v637 = vsub.s32 %v636, 2
    %vm638 = vcmp.gt.s32.totalorder 0, %v637
    %v639 = vsel %vm638, 0, %v637
    %v640 = vsub.s32 32, %v639
    %v641 = vshll.u32 %v632, %v639
    %v642 = vshrl.u32 %v624, %v640
    %v643 = vor.u32 %v641, %v642
    %v644 = vsub.s32 4294967266, %v639
    %v645 = vadd.s32 %v644, 127
    %v646 = vshll.u32 %v645, 23
    %v647 = vor.u32 4788187, %v646
    %v648 = vand.u32 2147483647, %v647
    %v650 = vcvt.s32.f32 %v643
    %v651 = vmul.f32 %v650, %v648
    %v652 = vxor.u32 %v651, 2147483648
    %v653 = vsel %vm570, %v652, %v651
    %v654 = vsub.s32 4, %v630
    %v655 = vsel %vm570, %v654, %v630
    %v656 = vsel %vm569, %v462, %v653
    %v657 = vsel %vm569, 0, %v655
    %v658 = vcosq.f32.pop %v656
    %v659 = vsinq.f32.pop %v656
    %vm660 = vweird.f32 %v462
    %v661 = vand.u32 %v657, 3
    %vm662 = vcmp.lt.s32.totalorder %v661, 2
    %vm663 = vcmp.eq.s32.totalorder %v661, 0
    %v664 = vxor.u32 %v659, 2147483648
    %v665 = vsel %vm663, %v658, %v664
    %vm666 = vcmp.eq.s32.totalorder %v661, 2
    %v667 = vxor.u32 %v658, 2147483648
    %v668 = vsel %vm666, %v667, %v659
    %v669 = vsel %vm662, %v665, %v668
    %v670 = vsel %vm660, nan, %v669
    %671 = vst [vmem:[#allocation5 + $0x28] sm:$0xff] %v670
    // Predicated region
    $region10: #{tpu_custom_call.1} parent=1 // pred_check
      _
    $region11: #{tpu_custom_call.1} parent=1 // pred_check_branch
      %673 = sbr.rel (0) target = $region13
    $region12: #{tpu_custom_call.1} parent=1 // pred_region
      %s675 = ssub.s32 768, 768
      %676 = vsyncadd [#allocation4], %s675
      %s677 = sshll.u32 [#allocation5], 4
      %s678 = int_to_ptr.vmem [resolvable:$true] %s677
      %683 = dma.vmem_to_hbm [thread:$0]  %s678, 768, %s1, [#allocation4], 128, 128, 8
    $region13: #{tpu_custom_call.1} parent=1 // pred_fallthru
      _
    // Predicated region
    $region14: #{tpu_custom_call.1} parent=1 // pred_check
      _
    $region15: #{tpu_custom_call.1} parent=1 // pred_check_branch
      %685 = sbr.rel (0) target = $region17
    $region16: #{tpu_custom_call.1} parent=1 // pred_region
      %686 = dma.done [#allocation4], 768
    $region17: #{tpu_custom_call.1} parent=1 // pred_fallthru
      _
    %687 = vsyncpa [#allocation3], 1
    %688 = vsyncpa [#allocation4], 1

</llo_original>
